<compile_context>
chip_gen: v7x
topology: tpu7x:2x2x1
jax: 0.10.0
libtpu: 0.0.40
codegen_flags: <defaults>
</compile_context>

<pallas_src>
import jax
import jax.numpy as jnp
import numpy as np
from jax import lax
from jax.experimental import pallas as pl
from jax.experimental.pallas import tpu as pltpu


def _embeddings_kernel(p_ref, w_ref, pos_cls_ref, pos_patch_ref, out_ref):
    # p_ref:         (Bb, N, K)        compute-dtype patches for Bb images of this step
    # w_ref:         (K, hidden)       compute-dtype conv weight, pre-transposed (resident)
    # pos_cls_ref:   (1, hidden)       f32: pos[0] + cls_token (resident)
    # pos_patch_ref: (N, hidden)       f32: pos[1:] + conv bias (resident)
    # out_ref:       (Bb, N+1, hidden) output rows for this batch tile
    n_patches = p_ref.shape[1]
    w = w_ref[...]                                     # hoisted loads (fetched once)
    pos_patch = pos_patch_ref[...]
    cls_row = pos_cls_ref[...].astype(out_ref.dtype)   # (1, hidden)
    for b in range(p_ref.shape[0]):                    # static unroll over the batch tile
        emb = jnp.dot(p_ref[b], w, preferred_element_type=jnp.float32)   # (N, hidden) f32 acc
        out_ref[b, 0:1, :] = cls_row                                     # cls token row
        out_ref[b, pl.ds(1, n_patches), :] = (emb + pos_patch).astype(out_ref.dtype)


def vit_embeddings(x_nchw, conv_w, conv_b, cls_token, pos_emb, patch_size, *,
                   compute_dtype=jnp.bfloat16, out_dtype=None, batch_tile=8,
                   vmem_budget_bytes=28 * 1024 * 1024):
    """x_nchw: (B, C, H, W).  conv_w: (hidden, C, P, P) (PyTorch layout).
    conv_b: (hidden,).  cls_token: (1, 1, hidden).  pos_emb: (1, N+1, hidden).
    Returns (B, N+1, hidden) in out_dtype (default: compute_dtype = bf16)."""
    B, C, H, W = x_nchw.shape
    P = patch_size
    hidden = conv_w.shape[0]
    gh, gw = H // P, W // P
    N = gh * gw
    K = C * P * P
    n_rows = N + 1
    if out_dtype is None:
        out_dtype = compute_dtype   # bf16 output: halves the largest HBM stream

    # --- patch extraction (cast + transpose; pad pass removed) -------------------------
    # With allow_input_fusion on this operand, XLA may fuse this producer into the
    # pallas_call input instead of materializing the (B, N, K) array in HBM.
    patches = x_nchw.reshape(B, C, gh, P, gw, P)
    patches = jnp.transpose(patches, (0, 2, 4, 1, 3, 5)).reshape(B, N, K).astype(compute_dtype)

    # --- one-time parameter-side transforms (tiny; constant-folded under jit) ----------
    w_mat = jnp.transpose(conv_w.reshape(hidden, K)).astype(compute_dtype)     # (K, hidden)
    pos = pos_emb[0].astype(jnp.float32)                                       # (N+1, hidden)
    pos_cls = pos[0:1] + cls_token[0].astype(jnp.float32)                      # (1, hidden)
    pos_patch = pos[1:] + conv_b[None, :].astype(jnp.float32)                  # (N, hidden)

    # --- batch tiling: amortize per-step overhead, sized for v7x's 64 MiB/TC VMEM ------
    esize = np.dtype(compute_dtype).itemsize
    osize = np.dtype(out_dtype).itemsize
    per_image = N * K * esize + n_rows * hidden * osize          # double-buffered per step
    resident = K * hidden * esize + n_rows * hidden * 4          # weight + pos tables (f32)
    bb = max(1, min(batch_tile, B))
    while B % bb:
        bb -= 1
    while bb > 1 and 2 * (bb * per_image + resident) > vmem_budget_bytes:
        bb -= 1
        while B % bb:
            bb -= 1

    out = pl.pallas_call(
        _embeddings_kernel,
        out_shape=jax.ShapeDtypeStruct((B, n_rows, hidden), out_dtype),
        grid_spec=pltpu.PrefetchScalarGridSpec(
            num_scalar_prefetch=0,
            grid=(B // bb,),
            in_specs=[
                pl.BlockSpec((bb, N, K), lambda g: (g, 0, 0)),       # patches (Bb images/step)
                pl.BlockSpec((K, hidden), lambda g: (0, 0)),         # weight   (resident)
                pl.BlockSpec((1, hidden), lambda g: (0, 0)),         # cls row  (resident)
                pl.BlockSpec((N, hidden), lambda g: (0, 0)),         # pos+bias (resident)
            ],
            out_specs=pl.BlockSpec((bb, n_rows, hidden), lambda g: (g, 0, 0)),
        ),
        compiler_params=pltpu.CompilerParams(
            dimension_semantics=("parallel",),
            # Above v5e's 16 MiB default scoped VMEM, safely below v7x's 64 MiB/TC physical.
            vmem_limit_bytes=32 * 1024 * 1024,
            # Allow XLA to fuse the patch cast+transpose producer into the kernel input,
            # eliminating the intermediate (B, N, K) HBM round trip when it fires.
            allow_input_fusion=[True, False, False, False],
        ),
    )(patches, w_mat, pos_cls, pos_patch)
    return out


# ------------------------------ references ---------------------------------------------
def _reference_f32(x, conv_w, conv_b, cls_token, pos_emb, P):
    """Plain-JAX f32 reference matching the PyTorch forward (dropout = identity)."""
    B, C, H, W = x.shape
    hidden = conv_w.shape[0]
    gh, gw = H // P, W // P
    N = gh * gw
    patches = x.reshape(B, C, gh, P, gw, P)
    patches = jnp.transpose(patches, (0, 2, 4, 1, 3, 5)).reshape(B, N, C * P * P)
    emb = patches @ conv_w.reshape(hidden, -1).T + conv_b[None, None, :]
    cls = jnp.broadcast_to(cls_token, (B, 1, hidden))
    return jnp.concatenate([cls, emb], axis=1) + pos_emb


def _reference_kernel_math(x, conv_w, conv_b, cls_token, pos_emb, P,
                           compute_dtype=jnp.bfloat16, out_dtype=jnp.bfloat16):
    """Same operand dtypes / f32 accumulation / output rounding as the kernel (tight check)."""
    B, C, H, W = x.shape
    hidden = conv_w.shape[0]
    gh, gw = H // P, W // P
    N = gh * gw
    patches = x.reshape(B, C, gh, P, gw, P)
    patches = jnp.transpose(patches, (0, 2, 4, 1, 3, 5)).reshape(B, N, C * P * P)
    patches = patches.astype(compute_dtype)
    w = jnp.transpose(conv_w.reshape(hidden, -1)).astype(compute_dtype)     # (K, hidden)
    emb = lax.dot_general(patches, w, (((2,), (0,)), ((), ())),
                          preferred_element_type=jnp.float32)               # (B, N, hidden)
    pos = pos_emb[0].astype(jnp.float32)
    out_patch = (emb + (pos[1:] + conv_b[None, :])[None]).astype(out_dtype)
    out_cls = jnp.broadcast_to((pos[0:1] + cls_token[0]).astype(out_dtype)[None],
                               (B, 1, hidden))
    return jnp.concatenate([out_cls, out_patch], axis=1)


if __name__ == "__main__":
    key = jax.random.PRNGKey(0)
    k1, k2, k3, k4, k5 = jax.random.split(key, 5)

    # Small shapes consistent with the module (non-overlap split):
    B, C, IMG, P, HIDDEN = 2, 4, 16, 8, 32
    N = (IMG // P) * (IMG // P)          # 4 patches -> sequence length 5

    x = jax.random.normal(k1, (B, C, IMG, IMG), dtype=jnp.float32)
    conv_w = jax.random.normal(k2, (HIDDEN, C, P, P), dtype=jnp.float32) * 0.02
    conv_b = jax.random.normal(k3, (HIDDEN,), dtype=jnp.float32) * 0.02
    # PyTorch inits these to zeros; use small random values for a non-trivial check.
    cls_token = jax.random.normal(k4, (1, 1, HIDDEN), dtype=jnp.float32) * 0.02
    pos_emb = jax.random.normal(k5, (1, N + 1, HIDDEN), dtype=jnp.float32) * 0.02

    out = vit_embeddings(x, conv_w, conv_b, cls_token, pos_emb, P)
    out = jax.block_until_ready(out)
    assert out.shape == (B, N + 1, HIDDEN), out.shape
    assert out.dtype == jnp.bfloat16, out.dtype
    out_f32 = jnp.asarray(out, jnp.float32)

    # Tight check: reference using identical bf16 operands, f32 accumulation, bf16 output.
    ref_tight = jnp.asarray(
        _reference_kernel_math(x, conv_w, conv_b, cls_token, pos_emb, P), jnp.float32)
    err_tight = float(jnp.max(jnp.abs(out_f32 - ref_tight)))
    assert jnp.allclose(out_f32, ref_tight, atol=2e-2, rtol=2e-2), err_tight

    # Looser check vs. exact f32 module semantics (bf16 matmul + bf16 output rounding only).
    ref32 = _reference_f32(x, conv_w, conv_b, cls_token, pos_emb, P)
    err32 = float(jnp.max(jnp.abs(out_f32 - ref32)))
    assert jnp.allclose(out_f32, ref32, atol=5e-2, rtol=5e-2), err32

    print("KERNEL_OK")
</pallas_src>

<mosaic_0001>
module attributes {stable_mosaic.version = 11 : i64} {
  func.func @_embeddings_kernel(%arg0: i32, %arg1: memref<2x4x256xbf16, #tpu.memory_space<vmem>>, %arg2: memref<256x32xbf16, #tpu.memory_space<vmem>>, %arg3: memref<1x32xf32, #tpu.memory_space<vmem>>, %arg4: memref<4x32xf32, #tpu.memory_space<vmem>>, %arg5: memref<2x5x32xbf16, #tpu.memory_space<vmem>>) attributes {dimension_semantics = [#tpu.dimension_semantics<parallel>], iteration_bounds = array<i64: 1>, scalar_prefetch = 0 : i64, scratch_operands = 0 : i64, tpu.core_type = #tpu.core_type<tc>, window_params = [{transform_indices = @transform_0, window_bounds = array<i64: 2, 4, 256>}, {pipeline_mode = #tpu.pipeline_mode<synchronous>, transform_indices = @transform_1, window_bounds = array<i64: 256, 32>}, {pipeline_mode = #tpu.pipeline_mode<synchronous>, transform_indices = @transform_2, window_bounds = array<i64: 1, 32>}, {pipeline_mode = #tpu.pipeline_mode<synchronous>, transform_indices = @transform_3, window_bounds = array<i64: 4, 32>}, {transform_indices = @transform_4, window_bounds = array<i64: 2, 5, 32>}]} {
    %c0 = arith.constant 0 : index
    %c0_0 = arith.constant 0 : index
    %0 = vector.load %arg2[%c0, %c0_0] : memref<256x32xbf16, #tpu.memory_space<vmem>>, vector<256x32xbf16>
    %c0_1 = arith.constant 0 : index
    %c0_2 = arith.constant 0 : index
    %1 = vector.load %arg4[%c0_1, %c0_2] : memref<4x32xf32, #tpu.memory_space<vmem>>, vector<4x32xf32>
    %c0_3 = arith.constant 0 : index
    %c0_4 = arith.constant 0 : index
    %2 = vector.load %arg3[%c0_3, %c0_4] : memref<1x32xf32, #tpu.memory_space<vmem>>, vector<1x32xf32>
    %3 = arith.truncf %2 : vector<1x32xf32> to vector<1x32xbf16>
    %c0_5 = arith.constant 0 : index
    %c0_6 = arith.constant 0 : index
    %c0_7 = arith.constant 0 : index
    %4 = vector.load %arg1[%c0_5, %c0_6, %c0_7] : memref<2x4x256xbf16, #tpu.memory_space<vmem>>, vector<1x4x256xbf16>
    %5 = vector.shape_cast %4 : vector<1x4x256xbf16> to vector<4x256xbf16>
    %cst = arith.constant dense<0.000000e+00> : vector<4x32xf32>
    %6 = tpu.matmul %5, %0, %cst {dimension_numbers = #tpu.dot_dimension_numbers<[1], [0], [0], [1], [0, 0, 1, 1], [], []>} : vector<4x256xbf16>, vector<256x32xbf16>, vector<4x32xf32> -> vector<4x32xf32>
    %c0_8 = arith.constant 0 : index
    %c0_9 = arith.constant 0 : index
    %c0_10 = arith.constant 0 : index
    %7 = vector.load %arg5[%c0_8, %c0_9, %c0_10] : memref<2x5x32xbf16, #tpu.memory_space<vmem>>, vector<1x1x32xbf16>
    %8 = vector.shape_cast %7 : vector<1x1x32xbf16> to vector<1x32xbf16>
    %9 = vector.shape_cast %3 : vector<1x32xbf16> to vector<1x1x32xbf16>
    tpu.vector_store %arg5[%c0_8, %c0_9, %c0_10], %9 {strides = array<i32>} : memref<2x5x32xbf16, #tpu.memory_space<vmem>>, vector<1x1x32xbf16>,
    %10 = arith.addf %6, %1 : vector<4x32xf32>
    %11 = arith.truncf %10 : vector<4x32xf32> to vector<4x32xbf16>
    %c0_11 = arith.constant 0 : index
    %c1 = arith.constant 1 : index
    %c0_12 = arith.constant 0 : index
    %12 = vector.load %arg5[%c0_11, %c1, %c0_12] : memref<2x5x32xbf16, #tpu.memory_space<vmem>>, vector<1x4x32xbf16>
    %13 = vector.shape_cast %12 : vector<1x4x32xbf16> to vector<4x32xbf16>
    %14 = vector.shape_cast %11 : vector<4x32xbf16> to vector<1x4x32xbf16>
    tpu.vector_store %arg5[%c0_11, %c1, %c0_12], %14 {strides = array<i32>} : memref<2x5x32xbf16, #tpu.memory_space<vmem>>, vector<1x4x32xbf16>,
    %c1_13 = arith.constant 1 : index
    %c0_14 = arith.constant 0 : index
    %c0_15 = arith.constant 0 : index
    %15 = vector.load %arg1[%c1_13, %c0_14, %c0_15] : memref<2x4x256xbf16, #tpu.memory_space<vmem>>, vector<1x4x256xbf16>
    %16 = vector.shape_cast %15 : vector<1x4x256xbf16> to vector<4x256xbf16>
    %cst_16 = arith.constant dense<0.000000e+00> : vector<4x32xf32>
    %17 = tpu.matmul %16, %0, %cst_16 {dimension_numbers = #tpu.dot_dimension_numbers<[1], [0], [0], [1], [0, 0, 1, 1], [], []>} : vector<4x256xbf16>, vector<256x32xbf16>, vector<4x32xf32> -> vector<4x32xf32>
    %c1_17 = arith.constant 1 : index
    %c0_18 = arith.constant 0 : index
    %c0_19 = arith.constant 0 : index
    %18 = vector.load %arg5[%c1_17, %c0_18, %c0_19] : memref<2x5x32xbf16, #tpu.memory_space<vmem>>, vector<1x1x32xbf16>
    %19 = vector.shape_cast %18 : vector<1x1x32xbf16> to vector<1x32xbf16>
    %20 = vector.shape_cast %3 : vector<1x32xbf16> to vector<1x1x32xbf16>
    tpu.vector_store %arg5[%c1_17, %c0_18, %c0_19], %20 {strides = array<i32>} : memref<2x5x32xbf16, #tpu.memory_space<vmem>>, vector<1x1x32xbf16>,
    %21 = arith.addf %17, %1 : vector<4x32xf32>
    %22 = arith.truncf %21 : vector<4x32xf32> to vector<4x32xbf16>
    %c1_20 = arith.constant 1 : index
    %c1_21 = arith.constant 1 : index
    %c0_22 = arith.constant 0 : index
    %23 = vector.load %arg5[%c1_20, %c1_21, %c0_22] : memref<2x5x32xbf16, #tpu.memory_space<vmem>>, vector<1x4x32xbf16>
    %24 = vector.shape_cast %23 : vector<1x4x32xbf16> to vector<4x32xbf16>
    %25 = vector.shape_cast %22 : vector<4x32xbf16> to vector<1x4x32xbf16>
    tpu.vector_store %arg5[%c1_20, %c1_21, %c0_22], %25 {strides = array<i32>} : memref<2x5x32xbf16, #tpu.memory_space<vmem>>, vector<1x4x32xbf16>,
    return
  }
  func.func @transform_0(%arg0: i32) -> (i32, i32, i32) {
    %c0_i32 = arith.constant 0 : i32
    %c0_i32_0 = arith.constant 0 : i32
    %c0_i32_1 = arith.constant 0 : i32
    return %arg0, %c0_i32, %c0_i32_0 : i32, i32, i32
  }
  func.func @transform_1(%arg0: i32) -> (i32, i32) {
    %c0_i32 = arith.constant 0 : i32
    %c0_i32_0 = arith.constant 0 : i32
    %c0_i32_1 = arith.constant 0 : i32
    return %c0_i32, %c0_i32_0 : i32, i32
  }
  func.func @transform_2(%arg0: i32) -> (i32, i32) {
    %c0_i32 = arith.constant 0 : i32
    %c0_i32_0 = arith.constant 0 : i32
    %c0_i32_1 = arith.constant 0 : i32
    return %c0_i32, %c0_i32_0 : i32, i32
  }
  func.func @transform_3(%arg0: i32) -> (i32, i32) {
    %c0_i32 = arith.constant 0 : i32
    %c0_i32_0 = arith.constant 0 : i32
    %c0_i32_1 = arith.constant 0 : i32
    return %c0_i32, %c0_i32_0 : i32, i32
  }
  func.func @transform_4(%arg0: i32) -> (i32, i32, i32) {
    %c0_i32 = arith.constant 0 : i32
    %c0_i32_0 = arith.constant 0 : i32
    %c0_i32_1 = arith.constant 0 : i32
    return %arg0, %c0_i32, %c0_i32_0 : i32, i32, i32
  }
}

</mosaic_0001>

<llo_original>
// kernel: tpu_custom_call.1
$region0: #{tpu_custom_call.1}
  #allocation0 [shape = 'u32[]', space=smem, size = 0x4, offset = 0x4, fixed_abs, tag = 'smem constant byte address 0x4 - core index']
  #allocation1 [shape = 'u32[144,128]{1,0:T(1,128)}', space=vmem, size = 0x12000, scoped, tag = 'internal scratch']
  %s0 = inlined_call_operand.vmem [shape: bf16[2,4,256], index: 0, kind: input, shape index: {}]
  %s1 = inlined_call_operand.vmem [shape: bf16[256,32], index: 1, kind: input, shape index: {}]
  %s2 = inlined_call_operand.vmem [shape: f32[1,32], index: 2, kind: input, shape index: {}]
  %s3 = inlined_call_operand.vmem [shape: f32[4,32], index: 3, kind: input, shape index: {}]
  %s4 = inlined_call_operand.vmem [shape: bf16[2,5,32], index: 4, kind: output, shape index: {}]
  %s5 = sld [smem:[#allocation0]]
  $region26: #{tpu_custom_call.1} parent=0
    _
  %s7 = ssub.s32 1, %s5
  %s8 = scalar_select 0, %s7, %s5
  // Predicated region
  $region2: #{tpu_custom_call.1} parent=0 // pred_check
    _
  $region3: #{tpu_custom_call.1} parent=0 // pred_check_branch
    %10 = sbr.rel (0) target = $region5
  $region4: #{tpu_custom_call.1} parent=0 // pred_region
    _
  $region5: #{tpu_custom_call.1} parent=0 // pred_fallthru
    _
  // Predicated region
  $region6: #{tpu_custom_call.1} parent=0 // pred_check
    _
  $region7: #{tpu_custom_call.1} parent=0 // pred_check_branch
    %12 = sbr.rel (0) target = $region9
  $region8: #{tpu_custom_call.1} parent=0 // pred_region
    _
  $region9: #{tpu_custom_call.1} parent=0 // pred_fallthru
    _
  // Predicated region
  $region10: #{tpu_custom_call.1} parent=0 // pred_check
    _
  $region11: #{tpu_custom_call.1} parent=0 // pred_check_branch
    %14 = sbr.rel (0) target = $region13
  $region12: #{tpu_custom_call.1} parent=0 // pred_region
    _
  $region13: #{tpu_custom_call.1} parent=0 // pred_fallthru
    _
  // Predicated region
  $region14: #{tpu_custom_call.1} parent=0 // pred_check
    _
  $region15: #{tpu_custom_call.1} parent=0 // pred_check_branch
    %16 = sbr.rel (0) target = $region17
  $region16: #{tpu_custom_call.1} parent=0 // pred_region
    _
  $region17: #{tpu_custom_call.1} parent=0 // pred_fallthru
    _
  %v18 = vld [vmem:[%s1] sm:$0xf]
  %v19 = vld [vmem:[%s1 + $0x4] sm:$0xf]
  %v20 = vld [vmem:[%s1 + $0x8] sm:$0xf]
  %v21 = vld [vmem:[%s1 + $0xc] sm:$0xf]
  %v22 = vld [vmem:[%s1 + $0x10] sm:$0xf]
  %v23 = vld [vmem:[%s1 + $0x14] sm:$0xf]
  %v24 = vld [vmem:[%s1 + $0x18] sm:$0xf]
  %v25 = vld [vmem:[%s1 + $0x1c] sm:$0xf]
  %v26 = vld [vmem:[%s1 + $0x20] sm:$0xf]
  %v27 = vld [vmem:[%s1 + $0x24] sm:$0xf]
  %v28 = vld [vmem:[%s1 + $0x28] sm:$0xf]
  %v29 = vld [vmem:[%s1 + $0x2c] sm:$0xf]
  %v30 = vld [vmem:[%s1 + $0x30] sm:$0xf]
  %v31 = vld [vmem:[%s1 + $0x34] sm:$0xf]
  %v32 = vld [vmem:[%s1 + $0x38] sm:$0xf]
  %v33 = vld [vmem:[%s1 + $0x3c] sm:$0xf]
  %v34 = vld [vmem:[%s1 + $0x40] sm:$0xf]
  %v35 = vld [vmem:[%s1 + $0x44] sm:$0xf]
  %v36 = vld [vmem:[%s1 + $0x48] sm:$0xf]
  %v37 = vld [vmem:[%s1 + $0x4c] sm:$0xf]
  %v38 = vld [vmem:[%s1 + $0x50] sm:$0xf]
  %v39 = vld [vmem:[%s1 + $0x54] sm:$0xf]
  %v40 = vld [vmem:[%s1 + $0x58] sm:$0xf]
  %v41 = vld [vmem:[%s1 + $0x5c] sm:$0xf]
  %v42 = vld [vmem:[%s1 + $0x60] sm:$0xf]
  %v43 = vld [vmem:[%s1 + $0x64] sm:$0xf]
  %v44 = vld [vmem:[%s1 + $0x68] sm:$0xf]
  %v45 = vld [vmem:[%s1 + $0x6c] sm:$0xf]
  %v46 = vld [vmem:[%s1 + $0x70] sm:$0xf]
  %v47 = vld [vmem:[%s1 + $0x74] sm:$0xf]
  %v48 = vld [vmem:[%s1 + $0x78] sm:$0xf]
  %v49 = vld [vmem:[%s1 + $0x7c] sm:$0xf]
  %v50 = vld [vmem:[%s3] sm:$0xf]
  %v51 = vld [vmem:[%s2] sm:$0x1]
  %v52 = vpack.c.bf16 %v51, %v51
  %v53 = vld [vmem:[%s0] sm:$0xf]
  %vm54 = vcmask 253952
  %vm55 = vsmask.f32 256
  %vm56 = vmand %vm54, %vm55
  %v57 = vld [vmem:[%s4] sm:$0x1]
  %v58 = vsel %vm56, %v52, %v57
  %59 = vst [vmem:[%s4] sm:$0x1] %v58
  %v62 = vunpack.c.l.s4 1983009808
  %v63 = vunpack.c.0.s8 %v62
  %v64 = vlaneseq
  %v65 = vshrl.u32 %v64, 7
  %v66 = vsub.s32 %v63, %v65
  %v67 = vrot.slane %v53, %v66
  %v68 = vcombine.high %v67, %v67
  %v103 = vunpack.c.l.b16 %v18
  %v104 = vunpack.c.l.b16 %v19
  %v105 = vunpack.c.l.b16 %v20
  %v106 = vunpack.c.l.b16 %v21
  %v107 = vunpack.c.l.b16 %v22
  %v108 = vunpack.c.l.b16 %v23
  %v109 = vunpack.c.l.b16 %v24
  %v110 = vunpack.c.l.b16 %v25
  %v111 = vunpack.c.l.b16 %v26
  %v112 = vunpack.c.l.b16 %v27
  %v113 = vunpack.c.l.b16 %v28
  %v114 = vunpack.c.l.b16 %v29
  %v115 = vunpack.c.l.b16 %v30
  %v116 = vunpack.c.l.b16 %v31
  %v117 = vunpack.c.l.b16 %v32
  %v118 = vunpack.c.l.b16 %v33
  %v119 = vunpack.c.l.b16 %v34
  %v120 = vunpack.c.l.b16 %v35
  %v121 = vunpack.c.l.b16 %v36
  %v122 = vunpack.c.l.b16 %v37
  %v123 = vunpack.c.l.b16 %v38
  %v124 = vunpack.c.l.b16 %v39
  %v125 = vunpack.c.l.b16 %v40
  %v126 = vunpack.c.l.b16 %v41
  %v127 = vunpack.c.l.b16 %v42
  %v128 = vunpack.c.l.b16 %v43
  %v129 = vunpack.c.l.b16 %v44
  %v130 = vunpack.c.l.b16 %v45
  %v131 = vunpack.c.l.b16 %v46
  %v132 = vunpack.c.l.b16 %v47
  %v133 = vunpack.c.l.b16 %v48
  %v134 = vunpack.c.l.b16 %v49
  %v135 = vpack.c.b16 %v104, %v103
  %v136 = vpack.c.b16 %v106, %v105
  %v137 = vpack.c.b16 %v108, %v107
  %v138 = vpack.c.b16 %v110, %v109
  %v139 = vpack.c.b16 %v112, %v111
  %v140 = vpack.c.b16 %v114, %v113
  %v141 = vpack.c.b16 %v116, %v115
  %v142 = vpack.c.b16 %v118, %v117
  %v143 = vpack.c.b16 %v120, %v119
  %v144 = vpack.c.b16 %v122, %v121
  %v145 = vpack.c.b16 %v124, %v123
  %v146 = vpack.c.b16 %v126, %v125
  %v147 = vpack.c.b16 %v128, %v127
  %v148 = vpack.c.b16 %v130, %v129
  %v149 = vpack.c.b16 %v132, %v131
  %v150 = vpack.c.b16 %v134, %v133
  %167 = vmatprep.subr.bf16.mxu0 0
  %168 = vmatpush1.bf16.msra.mxu0 %v135
  %169 = vmatprep.subr.bf16.mxu0 0
  %170 = vmatpush1.bf16.msra.mxu0 %v136
  %171 = vmatprep.subr.bf16.mxu0 0
  %172 = vmatpush1.bf16.msra.mxu0 %v137
  %173 = vmatprep.subr.bf16.mxu0 0
  %174 = vmatpush1.bf16.msra.mxu0 %v138
  %175 = vmatprep.subr.bf16.mxu0 0
  %176 = vmatpush1.bf16.msra.mxu0 %v139
  %177 = vmatprep.subr.bf16.mxu0 0
  %178 = vmatpush1.bf16.msra.mxu0 %v140
  %179 = vmatprep.subr.bf16.mxu0 0
  %180 = vmatpush1.bf16.msra.mxu0 %v141
  %181 = vmatprep.subr.bf16.mxu0 0
  %182 = vmatpush1.bf16.msra.mxu0 %v142
  %183 = vmatprep.subr.bf16.mxu0 0
  %184 = vmatpush1.bf16.msra.mxu0 %v143
  %185 = vmatprep.subr.bf16.mxu0 0
  %186 = vmatpush1.bf16.msra.mxu0 %v144
  %187 = vmatprep.subr.bf16.mxu0 0
  %188 = vmatpush1.bf16.msra.mxu0 %v145
  %189 = vmatprep.subr.bf16.mxu0 0
  %190 = vmatpush1.bf16.msra.mxu0 %v146
  %191 = vmatprep.subr.bf16.mxu0 0
  %192 = vmatpush1.bf16.msra.mxu0 %v147
  %193 = vmatprep.subr.bf16.mxu0 0
  %194 = vmatpush1.bf16.msra.mxu0 %v148
  %195 = vmatprep.subr.bf16.mxu0 0
  %196 = vmatpush1.bf16.msra.mxu0 %v149
  %197 = vmatprep.subr.bf16.mxu0 0
  %198 = vmatpush1.bf16.msra.mxu0 %v150
  %199 = vmatprep.mubr.bf16.mxu0 %v68
  %200 = vmatmul.mubr.bf16.gmra.mrb[0].mxu0 %v67
  %v201 = vpop.f32.mrb[0].mxu0
  %v202 = vadd.f32 %v50, %v201
  %v203 = vpop.f32.mrb[0].mxu0
  %v204 = vpop.f32.mrb[0].mxu0
  %v205 = vpop.f32.mrb[0].mxu0
  %206 = vdwg.mxu0
  %v207 = vpack.c.bf16 %v202, %v202
  %v209 = vunpack.c.l.b16 %v207
  %v210 = vpack.c.b16 %v209, %v209
  %v212 = vshrl.u32 %v210, 16
  %v214 = vrot.slane %v212, 7
  %v215 = vshll.u32 %v210, 16
  %v217 = vor.u32 %v214, %v215
  %vm219 = vcmask 256000
  %vm220 = vsmask.f32 2306
  %vm221 = vmand %vm219, %vm220
  %v222 = vld [vmem:[%s4] sm:$0x7]
  %v223 = vsel %vm221, %v217, %v222
  %224 = vst [vmem:[%s4] sm:$0x7] %v223
  %s225 = scalar_lea.vmem %s0, 4
  %v226 = vld [vmem:[%s225] sm:$0xf]
  %s227 = scalar_lea.vmem %s4, 4
  %v228 = vld [vmem:[%s227] sm:$0x1]
  %v229 = vsel %vm56, %v52, %v228
  %230 = vst [vmem:[%s227] sm:$0x1] %v229
  %v233 = vunpack.c.l.s4 1983009808
  %v234 = vunpack.c.0.s8 %v233
  %v235 = vlaneseq
  %v236 = vshrl.u32 %v235, 7
  %v237 = vsub.s32 %v234, %v236
  %v238 = vrot.slane %v226, %v237
  %v239 = vcombine.high %v238, %v238
  %242 = vmatprep.subr.bf16.mxu0 0
  %243 = vmatpush1.bf16.msra.mxu0 %v135
  %244 = vmatprep.subr.bf16.mxu0 0
  %245 = vmatpush1.bf16.msra.mxu0 %v136
  %246 = vmatprep.subr.bf16.mxu0 0
  %247 = vmatpush1.bf16.msra.mxu0 %v137
  %248 = vmatprep.subr.bf16.mxu0 0
  %249 = vmatpush1.bf16.msra.mxu0 %v138
  %250 = vmatprep.subr.bf16.mxu0 0
  %251 = vmatpush1.bf16.msra.mxu0 %v139
  %252 = vmatprep.subr.bf16.mxu0 0
  %253 = vmatpush1.bf16.msra.mxu0 %v140
  %254 = vmatprep.subr.bf16.mxu0 0
  %255 = vmatpush1.bf16.msra.mxu0 %v141
  %256 = vmatprep.subr.bf16.mxu0 0
  %257 = vmatpush1.bf16.msra.mxu0 %v142
  %258 = vmatprep.subr.bf16.mxu0 0
  %259 = vmatpush1.bf16.msra.mxu0 %v143
  %260 = vmatprep.subr.bf16.mxu0 0
  %261 = vmatpush1.bf16.msra.mxu0 %v144
  %262 = vmatprep.subr.bf16.mxu0 0
  %263 = vmatpush1.bf16.msra.mxu0 %v145
  %264 = vmatprep.subr.bf16.mxu0 0
  %265 = vmatpush1.bf16.msra.mxu0 %v146
  %266 = vmatprep.subr.bf16.mxu0 0
  %267 = vmatpush1.bf16.msra.mxu0 %v147
  %268 = vmatprep.subr.bf16.mxu0 0
  %269 = vmatpush1.bf16.msra.mxu0 %v148
  %270 = vmatprep.subr.bf16.mxu0 0
  %271 = vmatpush1.bf16.msra.mxu0 %v149
  %272 = vmatprep.subr.bf16.mxu0 0
  %273 = vmatpush1.bf16.msra.mxu0 %v150
  %274 = vmatprep.mubr.bf16.mxu0 %v239
  %275 = vmatmul.mubr.bf16.gmra.mrb[0].mxu0 %v238
  %v276 = vpop.f32.mrb[0].mxu0
  %v277 = vadd.f32 %v50, %v276
  %v278 = vpop.f32.mrb[0].mxu0
  %v279 = vpop.f32.mrb[0].mxu0
  %v280 = vpop.f32.mrb[0].mxu0
  %281 = vdwg.mxu0
  %v282 = vpack.c.bf16 %v277, %v277
  %v284 = vunpack.c.l.b16 %v282
  %v285 = vpack.c.b16 %v284, %v284
  %v287 = vshrl.u32 %v285, 16
  %v289 = vrot.slane %v287, 7
  %v290 = vshll.u32 %v285, 16
  %v292 = vor.u32 %v289, %v290
  %v294 = vld [vmem:[%s227] sm:$0x7]
  %v295 = vsel %vm221, %v292, %v294
  %296 = vst [vmem:[%s227] sm:$0x7] %v295
  // Predicated region
  $region18: #{tpu_custom_call.1} parent=0 // pred_check
    _
  $region19: #{tpu_custom_call.1} parent=0 // pred_check_branch
    %298 = sbr.rel (0) target = $region21
  $region20: #{tpu_custom_call.1} parent=0 // pred_region
    _
  $region21: #{tpu_custom_call.1} parent=0 // pred_fallthru
    _
  // Predicated region
  $region22: #{tpu_custom_call.1} parent=0 // pred_check
    _
  $region23: #{tpu_custom_call.1} parent=0 // pred_check_branch
    %300 = sbr.rel (0) target = $region25
  $region24: #{tpu_custom_call.1} parent=0 // pred_region
    _
  $region25: #{tpu_custom_call.1} parent=0 // pred_fallthru
    _

</llo_original>
